<compile_context>
chip_gen: v6e
topology: v6e:2x2x1
jax: 0.10.0
libtpu: 0.0.40
codegen_flags: <defaults>
</compile_context>

<pallas_src>
import functools

import jax
import jax.numpy as jnp
from jax.experimental import pallas as pl
from jax.experimental.pallas import tpu as pltpu

LANE = 128      # vreg lane width (last-dim alignment)
SUBLANE = 8     # vreg sublane count (second-to-last-dim alignment)
MXU_WIDE = 256  # v6e/v7x MXU width


def _round_up(x, m):
    return ((x + m - 1) // m) * m


def _cdiv(a, b):
    return -(-a // b)


def _lane_pad(dim):
    """Pad a feature dim: one 128-lane vreg for tiny dims, 256-multiples (full
    v6e/v7x MXU width) for real-sized dims."""
    return LANE if dim <= LANE else _round_up(dim, MXU_WIDE)


# ---------------------------------------------------------------------------
# Kernel: fully fused 3-layer MLP on one (TM, in_p) batch tile.
# Weights/biases are VMEM-resident (constant index_maps in the BlockSpecs).
# ---------------------------------------------------------------------------
def mlp_kernel(x_ref, w1_ref, b1_ref, w2_ref, b2_ref, w3_ref, b3_ref, o_ref):
    x = x_ref[...]
    # Layer 1: MXU matmul, f32 accumulation; bias-add + ReLU in f32 on the VPU.
    h1 = jnp.dot(x, w1_ref[...], preferred_element_type=jnp.float32)
    h1 = jnp.maximum(h1 + b1_ref[...], 0.0)
    # Layer 2
    h2 = jnp.dot(h1.astype(w2_ref.dtype), w2_ref[...],
                 preferred_element_type=jnp.float32)
    h2 = jnp.maximum(h2 + b2_ref[...], 0.0)
    # Layer 3 (logits, no activation); lane-dense store in o_ref's dtype.
    out = jnp.dot(h2.astype(w3_ref.dtype), w3_ref[...],
                  preferred_element_type=jnp.float32)
    o_ref[...] = (out + b3_ref[...]).astype(o_ref.dtype)


# ---------------------------------------------------------------------------
# One-time parameter preparation (lane-padded, pre-transposed weights).
# ---------------------------------------------------------------------------
def _pad_linear(w, b, in_pad, out_pad, compute_dtype):
    in_f, out_f = w.shape
    w_p = jnp.zeros((in_pad, out_pad), compute_dtype)
    w_p = w_p.at[:in_f, :out_f].set(w.astype(compute_dtype))
    # Bias kept f32 so bias-add/ReLU stay f32 on every generation (incl. v5e).
    b_p = jnp.zeros((1, out_pad), jnp.float32)
    b_p = b_p.at[:, :out_f].set(b.reshape(1, -1).astype(jnp.float32))
    return w_p, b_p


def prepare_mlp_params(w1, b1, w2, b2, w3, b3, compute_dtype=jnp.float32):
    input_size, hidden = w1.shape
    num_classes = w3.shape[1]
    in_p = _lane_pad(input_size)
    hid_p = _lane_pad(hidden)
    out_p = _lane_pad(num_classes)
    w1p, b1p = _pad_linear(w1, b1, in_p, hid_p, compute_dtype)
    w2p, b2p = _pad_linear(w2, b2, hid_p, hid_p, compute_dtype)
    w3p, b3p = _pad_linear(w3, b3, hid_p, out_p, compute_dtype)
    return (w1p, b1p, w2p, b2p, w3p, b3p)


# ---------------------------------------------------------------------------
# Tile / VMEM accounting.
# ---------------------------------------------------------------------------
def _select_tile_and_vmem(batch, in_p, hid_p, out_p, compute_dtype, out_dtype,
                          vmem_budget_bytes):
    cb = jnp.dtype(compute_dtype).itemsize
    ob = jnp.dtype(out_dtype).itemsize
    # Weights/biases are fetched once (constant index_maps) but the automatic
    # pipeline still allocates double buffers for them -> count 2x.  For very
    # large hidden sizes, use bf16 weights (halves both the resident bytes and
    # the HBM DMA traffic).
    weight_bytes = 2 * cb * (in_p * hid_p + hid_p * hid_p + hid_p * out_p)
    bias_bytes = 2 * 4 * (hid_p + hid_p + out_p)
    # Per batch-row VMEM: double-buffered x / out streams + f32 intermediates.
    per_row = 2 * in_p * cb + 2 * out_p * ob + 2 * hid_p * 4

    avail = max(vmem_budget_bytes - weight_bytes - bias_bytes,
                SUBLANE * per_row)
    tm = (avail // per_row) // SUBLANE * SUBLANE
    tm = int(max(SUBLANE, min(tm, 2048)))
    tm = min(tm, _round_up(batch, SUBLANE))
    # v7x megacore: keep at least 2 grid steps when the batch allows it so
    # dimension_semantics=("parallel",) can split work across both TCs.
    if batch >= 2 * SUBLANE:
        tm = min(tm, _round_up(_cdiv(batch, 2), SUBLANE))
    tm = max(tm, SUBLANE)

    grid = _cdiv(batch, tm)
    footprint = weight_bytes + bias_bytes + tm * per_row
    # Explicit scoped-VMEM limit: >= actual usage (with headroom), capped well
    # under v7x's 64 MiB physical VMEM; also covers v5e's 16 MiB default.
    vmem_limit = int(min(60 * 1024 * 1024,
                         max(32 * 1024 * 1024, footprint + footprint // 4)))
    return tm, grid, vmem_limit


# ---------------------------------------------------------------------------
# Forward pass (jitted so the feature-pad fuses with the kernel launch).
# ---------------------------------------------------------------------------
def _mlp_forward_impl(x, params, num_classes, vmem_budget_bytes, out_dtype):
    w1p, b1p, w2p, b2p, w3p, b3p = params
    batch, input_size = x.shape
    in_p, hid_p = w1p.shape
    out_p = w3p.shape[1]
    compute_dtype = w1p.dtype

    tm, grid, vmem_limit = _select_tile_and_vmem(
        batch, in_p, hid_p, out_p, compute_dtype, out_dtype, vmem_budget_bytes)

    # Only the feature (lane) dim of x needs zero-padding (the padded weight
    # rows are zero, so padded columns must be zero too).  The batch dim is
    # NOT padded: the ragged last block is handled by Pallas and its rows are
    # never read back.  Under jit this pad fuses with surrounding ops.
    if input_size != in_p or x.dtype != compute_dtype:
        x_in = jnp.pad(x.astype(compute_dtype),
                       ((0, 0), (0, in_p - input_size)))
    else:
        x_in = x

    const = lambda a: pl.BlockSpec(a.shape, lambda i: (0, 0))

    flops = 2 * batch * (in_p * hid_p + hid_p * hid_p + hid_p * out_p)
    bytes_accessed = (
        x_in.size * x_in.dtype.itemsize
        + sum(int(p.size) * p.dtype.itemsize for p in params)
        + batch * out_p * jnp.dtype(out_dtype).itemsize)

    out_padded = pl.pallas_call(
        mlp_kernel,
        out_shape=jax.ShapeDtypeStruct((batch, out_p), out_dtype),
        grid=(grid,),
        in_specs=[
            pl.BlockSpec((tm, in_p), lambda i: (i, 0)),   # x: tiled over batch
            const(w1p), const(b1p),                        # weights/biases:
            const(w2p), const(b2p),                        #   VMEM-resident
            const(w3p), const(b3p),
        ],
        out_specs=pl.BlockSpec((tm, out_p), lambda i: (i, 0)),
        compiler_params=pltpu.CompilerParams(
            dimension_semantics=("parallel",),   # both TCs on v7x when grid>=2
            vmem_limit_bytes=vmem_limit),
        cost_estimate=pl.CostEstimate(flops=int(flops), transcendentals=0,
                                      bytes_accessed=int(bytes_accessed)),
    )(x_in, w1p, b1p, w2p, b2p, w3p, b3p)

    return out_padded[:, :num_classes]


@functools.partial(jax.jit,
                   static_argnames=("num_classes", "vmem_budget_bytes",
                                    "out_dtype"))
def mlp_forward(x, params, num_classes,
                vmem_budget_bytes=16 * 1024 * 1024,  # safe on every generation;
                out_dtype=jnp.float32):              # v6e callers may raise it
    return _mlp_forward_impl(x, params, num_classes, vmem_budget_bytes,
                             out_dtype)


# ---------------------------------------------------------------------------
# Parameter init mimicking nn.Linear defaults.
# ---------------------------------------------------------------------------
def init_linear(key, in_features, out_features):
    """uniform(-1/sqrt(in), 1/sqrt(in)); weight returned [in, out], bias [out]."""
    kw, kb = jax.random.split(key)
    bound = 1.0 / jnp.sqrt(jnp.float32(in_features))
    w = jax.random.uniform(kw, (in_features, out_features), jnp.float32,
                           minval=-bound, maxval=bound)
    b = jax.random.uniform(kb, (out_features,), jnp.float32,
                           minval=-bound, maxval=bound)
    return w, b


if __name__ == "__main__":
    batch = 8
    input_size = 32
    hidden_size = 64
    num_classes = 16

    key = jax.random.PRNGKey(0)
    kx, k1, k2, k3 = jax.random.split(key, 4)

    x = jax.random.normal(kx, (batch, input_size), jnp.float32)
    w1, b1 = init_linear(k1, input_size, hidden_size)
    w2, b2 = init_linear(k2, hidden_size, hidden_size)
    w3, b3 = init_linear(k3, hidden_size, num_classes)

    # Pure-JAX reference (matches the PyTorch module forward).
    h = jnp.maximum(x @ w1 + b1, 0.0)
    h = jnp.maximum(h @ w2 + b2, 0.0)
    ref = h @ w3 + b3

    # f32 path (matches the PyTorch module numerics).
    params_f32 = prepare_mlp_params(w1, b1, w2, b2, w3, b3, jnp.float32)
    out = jax.block_until_ready(mlp_forward(x, params_f32, num_classes))
    assert out.shape == (batch, num_classes)
    assert jnp.allclose(out, ref, atol=1e-5, rtol=1e-5)

    # bf16 matmul-input + bf16 output-stream path (v6e/v7x throughput and
    # halved HBM bytes; f32 accumulation / bias / ReLU inside the kernel).
    params_bf16 = prepare_mlp_params(w1, b1, w2, b2, w3, b3, jnp.bfloat16)
    out_bf16 = jax.block_until_ready(
        mlp_forward(x, params_bf16, num_classes, out_dtype=jnp.bfloat16))
    assert out_bf16.shape == (batch, num_classes)
    assert jnp.allclose(out_bf16.astype(jnp.float32), ref, atol=2e-1, rtol=2e-1)

    print("KERNEL_OK")
</pallas_src>

<mosaic_0001>
module attributes {stable_mosaic.version = 11 : i64} {
  func.func @mlp_kernel(%arg0: i32, %arg1: memref<8x128xf32, #tpu.memory_space<vmem>>, %arg2: memref<128x128xf32, #tpu.memory_space<vmem>>, %arg3: memref<1x128xf32, #tpu.memory_space<vmem>>, %arg4: memref<128x128xf32, #tpu.memory_space<vmem>>, %arg5: memref<1x128xf32, #tpu.memory_space<vmem>>, %arg6: memref<128x128xf32, #tpu.memory_space<vmem>>, %arg7: memref<1x128xf32, #tpu.memory_space<vmem>>, %arg8: memref<8x128xf32, #tpu.memory_space<vmem>>) attributes {dimension_semantics = [#tpu.dimension_semantics<parallel>], iteration_bounds = array<i64: 1>, scalar_prefetch = 0 : i64, scratch_operands = 0 : i64, tpu.core_type = #tpu.core_type<tc>, window_params = [{transform_indices = @transform_0, window_bounds = array<i64: 8, 128>}, {pipeline_mode = #tpu.pipeline_mode<synchronous>, transform_indices = @transform_1, window_bounds = array<i64: 128, 128>}, {pipeline_mode = #tpu.pipeline_mode<synchronous>, transform_indices = @transform_2, window_bounds = array<i64: 1, 128>}, {pipeline_mode = #tpu.pipeline_mode<synchronous>, transform_indices = @transform_3, window_bounds = array<i64: 128, 128>}, {pipeline_mode = #tpu.pipeline_mode<synchronous>, transform_indices = @transform_4, window_bounds = array<i64: 1, 128>}, {pipeline_mode = #tpu.pipeline_mode<synchronous>, transform_indices = @transform_5, window_bounds = array<i64: 128, 128>}, {pipeline_mode = #tpu.pipeline_mode<synchronous>, transform_indices = @transform_6, window_bounds = array<i64: 1, 128>}, {transform_indices = @transform_7, window_bounds = array<i64: 8, 128>}]} {
    %c0 = arith.constant 0 : index
    %c0_0 = arith.constant 0 : index
    %0 = vector.load %arg1[%c0, %c0_0] : memref<8x128xf32, #tpu.memory_space<vmem>>, vector<8x128xf32>
    %c0_1 = arith.constant 0 : index
    %c0_2 = arith.constant 0 : index
    %1 = vector.load %arg2[%c0_1, %c0_2] : memref<128x128xf32, #tpu.memory_space<vmem>>, vector<128x128xf32>
    %cst = arith.constant dense<0.000000e+00> : vector<8x128xf32>
    %2 = tpu.matmul %0, %1, %cst {dimension_numbers = #tpu.dot_dimension_numbers<[1], [0], [0], [1], [0, 0, 1, 1], [], []>} : vector<8x128xf32>, vector<128x128xf32>, vector<8x128xf32> -> vector<8x128xf32>
    %c0_3 = arith.constant 0 : index
    %c0_4 = arith.constant 0 : index
    %3 = vector.load %arg3[%c0_3, %c0_4] : memref<1x128xf32, #tpu.memory_space<vmem>>, vector<1x128xf32>
    %4 = vector.broadcast %3 : vector<1x128xf32> to vector<8x128xf32>
    %5 = arith.addf %2, %4 : vector<8x128xf32>
    %cst_5 = arith.constant 0.000000e+00 : f32
    %6 = vector.broadcast %cst_5 : f32 to vector<8x128xf32>
    %7 = arith.maximumf %5, %6 : vector<8x128xf32>
    %c0_6 = arith.constant 0 : index
    %c0_7 = arith.constant 0 : index
    %8 = vector.load %arg4[%c0_6, %c0_7] : memref<128x128xf32, #tpu.memory_space<vmem>>, vector<128x128xf32>
    %cst_8 = arith.constant dense<0.000000e+00> : vector<8x128xf32>
    %9 = tpu.matmul %7, %8, %cst_8 {dimension_numbers = #tpu.dot_dimension_numbers<[1], [0], [0], [1], [0, 0, 1, 1], [], []>} : vector<8x128xf32>, vector<128x128xf32>, vector<8x128xf32> -> vector<8x128xf32>
    %c0_9 = arith.constant 0 : index
    %c0_10 = arith.constant 0 : index
    %10 = vector.load %arg5[%c0_9, %c0_10] : memref<1x128xf32, #tpu.memory_space<vmem>>, vector<1x128xf32>
    %11 = vector.broadcast %10 : vector<1x128xf32> to vector<8x128xf32>
    %12 = arith.addf %9, %11 : vector<8x128xf32>
    %cst_11 = arith.constant 0.000000e+00 : f32
    %13 = vector.broadcast %cst_11 : f32 to vector<8x128xf32>
    %14 = arith.maximumf %12, %13 : vector<8x128xf32>
    %c0_12 = arith.constant 0 : index
    %c0_13 = arith.constant 0 : index
    %15 = vector.load %arg6[%c0_12, %c0_13] : memref<128x128xf32, #tpu.memory_space<vmem>>, vector<128x128xf32>
    %cst_14 = arith.constant dense<0.000000e+00> : vector<8x128xf32>
    %16 = tpu.matmul %14, %15, %cst_14 {dimension_numbers = #tpu.dot_dimension_numbers<[1], [0], [0], [1], [0, 0, 1, 1], [], []>} : vector<8x128xf32>, vector<128x128xf32>, vector<8x128xf32> -> vector<8x128xf32>
    %c0_15 = arith.constant 0 : index
    %c0_16 = arith.constant 0 : index
    %17 = vector.load %arg7[%c0_15, %c0_16] : memref<1x128xf32, #tpu.memory_space<vmem>>, vector<1x128xf32>
    %18 = vector.broadcast %17 : vector<1x128xf32> to vector<8x128xf32>
    %19 = arith.addf %16, %18 : vector<8x128xf32>
    %c0_17 = arith.constant 0 : index
    %c0_18 = arith.constant 0 : index
    %20 = vector.load %arg8[%c0_17, %c0_18] : memref<8x128xf32, #tpu.memory_space<vmem>>, vector<8x128xf32>
    tpu.vector_store %arg8[%c0_17, %c0_18], %19 {strides = array<i32>} : memref<8x128xf32, #tpu.memory_space<vmem>>, vector<8x128xf32>,
    return
  }
  func.func @transform_0(%arg0: i32) -> (i32, i32) {
    %c0_i32 = arith.constant 0 : i32
    %c0_i32_0 = arith.constant 0 : i32
    return %arg0, %c0_i32 : i32, i32
  }
  func.func @transform_1(%arg0: i32) -> (i32, i32) {
    %c0_i32 = arith.constant 0 : i32
    %c0_i32_0 = arith.constant 0 : i32
    %c0_i32_1 = arith.constant 0 : i32
    return %c0_i32, %c0_i32_0 : i32, i32
  }
  func.func @transform_2(%arg0: i32) -> (i32, i32) {
    %c0_i32 = arith.constant 0 : i32
    %c0_i32_0 = arith.constant 0 : i32
    %c0_i32_1 = arith.constant 0 : i32
    return %c0_i32, %c0_i32_0 : i32, i32
  }
  func.func @transform_3(%arg0: i32) -> (i32, i32) {
    %c0_i32 = arith.constant 0 : i32
    %c0_i32_0 = arith.constant 0 : i32
    %c0_i32_1 = arith.constant 0 : i32
    return %c0_i32, %c0_i32_0 : i32, i32
  }
  func.func @transform_4(%arg0: i32) -> (i32, i32) {
    %c0_i32 = arith.constant 0 : i32
    %c0_i32_0 = arith.constant 0 : i32
    %c0_i32_1 = arith.constant 0 : i32
    return %c0_i32, %c0_i32_0 : i32, i32
  }
  func.func @transform_5(%arg0: i32) -> (i32, i32) {
    %c0_i32 = arith.constant 0 : i32
    %c0_i32_0 = arith.constant 0 : i32
    %c0_i32_1 = arith.constant 0 : i32
    return %c0_i32, %c0_i32_0 : i32, i32
  }
  func.func @transform_6(%arg0: i32) -> (i32, i32) {
    %c0_i32 = arith.constant 0 : i32
    %c0_i32_0 = arith.constant 0 : i32
    %c0_i32_1 = arith.constant 0 : i32
    return %c0_i32, %c0_i32_0 : i32, i32
  }
  func.func @transform_7(%arg0: i32) -> (i32, i32) {
    %c0_i32 = arith.constant 0 : i32
    %c0_i32_0 = arith.constant 0 : i32
    return %arg0, %c0_i32 : i32, i32
  }
}

</mosaic_0001>

<llo_original>
// kernel: mlp_forward.1
$region0: #{mlp_forward.1}
  #allocation0 [shape = 'u32[]', space=smem, size = 0x4, offset = 0x4, fixed_abs, tag = 'smem constant byte address 0x4 - core index']
  #allocation1 [shape = 'u32[144,128]{1,0:T(1,128)}', space=vmem, size = 0x12000, scoped, tag = 'internal scratch']
  %s0 = inlined_call_operand.vmem [shape: f32[8,128], index: 0, kind: input, shape index: {}]
  %s1 = inlined_call_operand.hbm [shape: f32[128,128], index: 1, kind: input, shape index: {}]
  %s2 = inlined_call_operand.vmem [shape: f32[1,128], index: 2, kind: input, shape index: {}]
  %s3 = inlined_call_operand.hbm [shape: f32[128,128], index: 3, kind: input, shape index: {}]
  %s4 = inlined_call_operand.vmem [shape: f32[1,128], index: 4, kind: input, shape index: {}]
  %s5 = inlined_call_operand.hbm [shape: f32[128,128], index: 5, kind: input, shape index: {}]
  %s6 = inlined_call_operand.vmem [shape: f32[1,128], index: 6, kind: input, shape index: {}]
  %s7 = inlined_call_operand.hbm [shape: f32[8,128], index: 7, kind: output, shape index: {}]
  %s8 = sld [smem:[#allocation0]]
  $region50: #{mlp_forward.1} parent=0
    _
  %s10 = ssub.s32 1, %s8
  %s11 = scalar_select 0, %s10, %s8
  $region1: #{mlp_forward.1} parent=0
    #allocation2 [shape = 'u8[65536]{0}', space=vmem, size = 0x10000, scoped, tag = 'input window, operand 1, single buffered']
    #allocation3 [shape = 's32[1]{0}', space=sflag, size = 0x4, scoped, tag = 'scoped memory for mlp_forward.1']
    #allocation4 [shape = 's32[1]{0}', space=sflag, size = 0x4, scoped, tag = 'scoped memory for mlp_forward.1']
    #allocation5 [shape = 'u8[65536]{0}', space=vmem, size = 0x10000, scoped, tag = 'input window, operand 3, single buffered']
    #allocation6 [shape = 's32[1]{0}', space=sflag, size = 0x4, scoped, tag = 'scoped memory for mlp_forward.1']
    #allocation7 [shape = 'u8[65536]{0}', space=vmem, size = 0x10000, scoped, tag = 'input window, operand 5, single buffered']
    #allocation8 [shape = 'u8[4096]{0}', space=vmem, size = 0x1000, scoped, tag = 'output window, operand 0, single buffered']
    %12 = vsyncpa [#allocation3], 0
    %13 = vsyncpa [#allocation6], 0
    %14 = vsyncpa [#allocation4], 0
    // Predicated region
    $region2: #{mlp_forward.1} parent=1 // pred_check
      _
    $region3: #{mlp_forward.1} parent=1 // pred_check_branch
      %16 = sbr.rel (0) target = $region5
    $region4: #{mlp_forward.1} parent=1 // pred_region
      _
    $region5: #{mlp_forward.1} parent=1 // pred_fallthru
      _
    // Predicated region
    $region6: #{mlp_forward.1} parent=1 // pred_check
      _
    $region7: #{mlp_forward.1} parent=1 // pred_check_branch
      %18 = sbr.rel (0) target = $region9
    $region8: #{mlp_forward.1} parent=1 // pred_region
      %s20 = ssub.s32 2048, 2048
      %21 = vsyncadd [#allocation3], %s20
      %s22 = sshll.u32 [#allocation2], 4
      %s23 = int_to_ptr.vmem [resolvable:$true] %s22
      %28 = dma.hbm_to_vmem [thread:$0]  %s1, 2048, %s23, [#allocation3], 128, 128, 8
    $region9: #{mlp_forward.1} parent=1 // pred_fallthru
      _
    // Predicated region
    $region10: #{mlp_forward.1} parent=1 // pred_check
      _
    $region11: #{mlp_forward.1} parent=1 // pred_check_branch
      %30 = sbr.rel (0) target = $region13
    $region12: #{mlp_forward.1} parent=1 // pred_region
      _
    $region13: #{mlp_forward.1} parent=1 // pred_fallthru
      _
    // Predicated region
    $region14: #{mlp_forward.1} parent=1 // pred_check
      _
    $region15: #{mlp_forward.1} parent=1 // pred_check_branch
      %32 = sbr.rel (0) target = $region17
    $region16: #{mlp_forward.1} parent=1 // pred_region
      %s34 = ssub.s32 2048, 2048
      %35 = vsyncadd [#allocation6], %s34
      %s36 = sshll.u32 [#allocation5], 4
      %s37 = int_to_ptr.vmem [resolvable:$true] %s36
      %42 = dma.hbm_to_vmem [thread:$0]  %s3, 2048, %s37, [#allocation6], 128, 128, 8
    $region17: #{mlp_forward.1} parent=1 // pred_fallthru
      _
    // Predicated region
    $region18: #{mlp_forward.1} parent=1 // pred_check
      _
    $region19: #{mlp_forward.1} parent=1 // pred_check_branch
      %44 = sbr.rel (0) target = $region21
    $region20: #{mlp_forward.1} parent=1 // pred_region
      _
    $region21: #{mlp_forward.1} parent=1 // pred_fallthru
      _
    // Predicated region
    $region22: #{mlp_forward.1} parent=1 // pred_check
      _
    $region23: #{mlp_forward.1} parent=1 // pred_check_branch
      %46 = sbr.rel (0) target = $region25
    $region24: #{mlp_forward.1} parent=1 // pred_region
      %s48 = ssub.s32 2048, 2048
      %49 = vsyncadd [#allocation6], %s48
      %s50 = sshll.u32 [#allocation7], 4
      %s51 = int_to_ptr.vmem [resolvable:$true] %s50
      %56 = dma.hbm_to_vmem [thread:$0]  %s5, 2048, %s51, [#allocation6], 128, 128, 8
    $region25: #{mlp_forward.1} parent=1 // pred_fallthru
      _
    // Predicated region
    $region26: #{mlp_forward.1} parent=1 // pred_check
      _
    $region27: #{mlp_forward.1} parent=1 // pred_check_branch
      %58 = sbr.rel (0) target = $region29
    $region28: #{mlp_forward.1} parent=1 // pred_region
      _
    $region29: #{mlp_forward.1} parent=1 // pred_fallthru
      _
    // Predicated region
    $region30: #{mlp_forward.1} parent=1 // pred_check
      _
    $region31: #{mlp_forward.1} parent=1 // pred_check_branch
      %60 = sbr.rel (0) target = $region33
    $region32: #{mlp_forward.1} parent=1 // pred_region
      %61 = dma.done [#allocation3], 2048
    $region33: #{mlp_forward.1} parent=1 // pred_fallthru
      _
    // Predicated region
    $region34: #{mlp_forward.1} parent=1 // pred_check
      _
    $region35: #{mlp_forward.1} parent=1 // pred_check_branch
      %63 = sbr.rel (0) target = $region37
    $region36: #{mlp_forward.1} parent=1 // pred_region
      %64 = dma.done [#allocation6], 2048
    $region37: #{mlp_forward.1} parent=1 // pred_fallthru
      _
    // Predicated region
    $region38: #{mlp_forward.1} parent=1 // pred_check
      _
    $region39: #{mlp_forward.1} parent=1 // pred_check_branch
      %66 = sbr.rel (0) target = $region41
    $region40: #{mlp_forward.1} parent=1 // pred_region
      %67 = dma.done [#allocation6], 2048
    $region41: #{mlp_forward.1} parent=1 // pred_fallthru
      _
    %v68 = vld [vmem:[%s0] sm:$0xff]
    %v69 = vld [vmem:[#allocation2] sm:$0xff]
    %v70 = vld [vmem:[#allocation2 + $0x8] sm:$0xff]
    %v71 = vld [vmem:[#allocation2 + $0x10] sm:$0xff]
    %v72 = vld [vmem:[#allocation2 + $0x18] sm:$0xff]
    %v73 = vld [vmem:[#allocation2 + $0x20] sm:$0xff]
    %v74 = vld [vmem:[#allocation2 + $0x28] sm:$0xff]
    %v75 = vld [vmem:[#allocation2 + $0x30] sm:$0xff]
    %v76 = vld [vmem:[#allocation2 + $0x38] sm:$0xff]
    %v77 = vld [vmem:[#allocation2 + $0x40] sm:$0xff]
    %v78 = vld [vmem:[#allocation2 + $0x48] sm:$0xff]
    %v79 = vld [vmem:[#allocation2 + $0x50] sm:$0xff]
    %v80 = vld [vmem:[#allocation2 + $0x58] sm:$0xff]
    %v81 = vld [vmem:[#allocation2 + $0x60] sm:$0xff]
    %v82 = vld [vmem:[#allocation2 + $0x68] sm:$0xff]
    %v83 = vld [vmem:[#allocation2 + $0x70] sm:$0xff]
    %v84 = vld [vmem:[#allocation2 + $0x78] sm:$0xff]
    %v85 = vld [vmem:[%s2] sm:$0x1]
    %v87 = vlaneseq
    %v88 = vshrl.u32 %v87, 7
    %v89 = vsub.s32 0, %v88
    %v90 = vrot.slane %v85, %v89
    %92 = vmatprep.subr.mxu0 0.0
    %93 = vmatpush1.msra.mxu0 %v84
    %94 = vmatprep.subr.mxu0 0.0
    %95 = vmatpush1.msra.mxu0 %v83
    %96 = vmatprep.subr.mxu0 0.0
    %97 = vmatpush1.msra.mxu0 %v82
    %98 = vmatprep.subr.mxu0 0.0
    %99 = vmatpush1.msra.mxu0 %v81
    %100 = vmatprep.subr.mxu0 0.0
    %101 = vmatpush1.msra.mxu0 %v80
    %102 = vmatprep.subr.mxu0 0.0
    %103 = vmatpush1.msra.mxu0 %v79
    %104 = vmatprep.subr.mxu0 0.0
    %105 = vmatpush1.msra.mxu0 %v78
    %106 = vmatprep.subr.mxu0 0.0
    %107 = vmatpush1.msra.mxu0 %v77
    %108 = vmatprep.subr.mxu0 0.0
    %109 = vmatpush1.msra.mxu0 %v76
    %110 = vmatprep.subr.mxu0 0.0
    %111 = vmatpush1.msra.mxu0 %v75
    %112 = vmatprep.subr.mxu0 0.0
    %113 = vmatpush1.msra.mxu0 %v74
    %114 = vmatprep.subr.mxu0 0.0
    %115 = vmatpush1.msra.mxu0 %v73
    %116 = vmatprep.subr.mxu0 0.0
    %117 = vmatpush1.msra.mxu0 %v72
    %118 = vmatprep.subr.mxu0 0.0
    %119 = vmatpush1.msra.mxu0 %v71
    %120 = vmatprep.subr.mxu0 0.0
    %121 = vmatpush1.msra.mxu0 %v70
    %122 = vmatprep.subr.mxu0 0.0
    %123 = vmatpush1.msra.mxu0 %v69
    %124 = vmatprep.subr.mxu0 0.0
    %125 = vmatpush2.msra.mxu0 0.0
    %126 = vmatprep.subr.mxu0 0.0
    %127 = vmatpush2.msra.mxu0 0.0
    %128 = vmatprep.subr.mxu0 0.0
    %129 = vmatpush2.msra.mxu0 0.0
    %130 = vmatprep.subr.mxu0 0.0
    %131 = vmatpush2.msra.mxu0 0.0
    %132 = vmatprep.subr.mxu0 0.0
    %133 = vmatpush2.msra.mxu0 0.0
    %134 = vmatprep.subr.mxu0 0.0
    %135 = vmatpush2.msra.mxu0 0.0
    %136 = vmatprep.subr.mxu0 0.0
    %137 = vmatpush2.msra.mxu0 0.0
    %138 = vmatprep.subr.mxu0 0.0
    %139 = vmatpush2.msra.mxu0 0.0
    %140 = vmatprep.subr.mxu0 0.0
    %141 = vmatpush2.msra.mxu0 0.0
    %142 = vmatprep.subr.mxu0 0.0
    %143 = vmatpush2.msra.mxu0 0.0
    %144 = vmatprep.subr.mxu0 0.0
    %145 = vmatpush2.msra.mxu0 0.0
    %146 = vmatprep.subr.mxu0 0.0
    %147 = vmatpush2.msra.mxu0 0.0
    %148 = vmatprep.subr.mxu0 0.0
    %149 = vmatpush2.msra.mxu0 0.0
    %150 = vmatprep.subr.mxu0 0.0
    %151 = vmatpush2.msra.mxu0 0.0
    %152 = vmatprep.subr.mxu0 0.0
    %153 = vmatpush2.msra.mxu0 0.0
    %154 = vmatprep.subr.mxu0 0.0
    %155 = vmatpush2.msra.mxu0 0.0
    %156 = vmatprep.mubr.f32.mxu0 0.0
    %157 = vmatmul.mubr.f32.gmra.mxu0 %v68
    %v158 = vpop.f32.mrf.mxu0
    %v159 = vadd.f32 %v90, %v158
    %v160 = vpop.f32.mrf.mxu0
    %161 = vdwg.mxu0
    %v162 = vmax.f32 %v159, 0.0
    %v163 = vld [vmem:[#allocation5] sm:$0xff]
    %v164 = vld [vmem:[#allocation5 + $0x8] sm:$0xff]
    %v165 = vld [vmem:[#allocation5 + $0x10] sm:$0xff]
    %v166 = vld [vmem:[#allocation5 + $0x18] sm:$0xff]
    %v167 = vld [vmem:[#allocation5 + $0x20] sm:$0xff]
    %v168 = vld [vmem:[#allocation5 + $0x28] sm:$0xff]
    %v169 = vld [vmem:[#allocation5 + $0x30] sm:$0xff]
    %v170 = vld [vmem:[#allocation5 + $0x38] sm:$0xff]
    %v171 = vld [vmem:[#allocation5 + $0x40] sm:$0xff]
    %v172 = vld [vmem:[#allocation5 + $0x48] sm:$0xff]
    %v173 = vld [vmem:[#allocation5 + $0x50] sm:$0xff]
    %v174 = vld [vmem:[#allocation5 + $0x58] sm:$0xff]
    %v175 = vld [vmem:[#allocation5 + $0x60] sm:$0xff]
    %v176 = vld [vmem:[#allocation5 + $0x68] sm:$0xff]
    %v177 = vld [vmem:[#allocation5 + $0x70] sm:$0xff]
    %v178 = vld [vmem:[#allocation5 + $0x78] sm:$0xff]
    %v179 = vld [vmem:[%s4] sm:$0x1]
    %v181 = vlaneseq
    %v182 = vshrl.u32 %v181, 7
    %v183 = vsub.s32 0, %v182
    %v184 = vrot.slane %v179, %v183
    %186 = vmatprep.subr.mxu0 0.0
    %187 = vmatpush1.msra.mxu0 %v178
    %188 = vmatprep.subr.mxu0 0.0
    %189 = vmatpush1.msra.mxu0 %v177
    %190 = vmatprep.subr.mxu0 0.0
    %191 = vmatpush1.msra.mxu0 %v176
    %192 = vmatprep.subr.mxu0 0.0
    %193 = vmatpush1.msra.mxu0 %v175
    %194 = vmatprep.subr.mxu0 0.0
    %195 = vmatpush1.msra.mxu0 %v174
    %196 = vmatprep.subr.mxu0 0.0
    %197 = vmatpush1.msra.mxu0 %v173
    %198 = vmatprep.subr.mxu0 0.0
    %199 = vmatpush1.msra.mxu0 %v172
    %200 = vmatprep.subr.mxu0 0.0
    %201 = vmatpush1.msra.mxu0 %v171
    %202 = vmatprep.subr.mxu0 0.0
    %203 = vmatpush1.msra.mxu0 %v170
    %204 = vmatprep.subr.mxu0 0.0
    %205 = vmatpush1.msra.mxu0 %v169
    %206 = vmatprep.subr.mxu0 0.0
    %207 = vmatpush1.msra.mxu0 %v168
    %208 = vmatprep.subr.mxu0 0.0
    %209 = vmatpush1.msra.mxu0 %v167
    %210 = vmatprep.subr.mxu0 0.0
    %211 = vmatpush1.msra.mxu0 %v166
    %212 = vmatprep.subr.mxu0 0.0
    %213 = vmatpush1.msra.mxu0 %v165
    %214 = vmatprep.subr.mxu0 0.0
    %215 = vmatpush1.msra.mxu0 %v164
    %216 = vmatprep.subr.mxu0 0.0
    %217 = vmatpush1.msra.mxu0 %v163
    %218 = vmatprep.subr.mxu0 0.0
    %219 = vmatpush2.msra.mxu0 0.0
    %220 = vmatprep.subr.mxu0 0.0
    %221 = vmatpush2.msra.mxu0 0.0
    %222 = vmatprep.subr.mxu0 0.0
    %223 = vmatpush2.msra.mxu0 0.0
    %224 = vmatprep.subr.mxu0 0.0
    %225 = vmatpush2.msra.mxu0 0.0
    %226 = vmatprep.subr.mxu0 0.0
    %227 = vmatpush2.msra.mxu0 0.0
    %228 = vmatprep.subr.mxu0 0.0
    %229 = vmatpush2.msra.mxu0 0.0
    %230 = vmatprep.subr.mxu0 0.0
    %231 = vmatpush2.msra.mxu0 0.0
    %232 = vmatprep.subr.mxu0 0.0
    %233 = vmatpush2.msra.mxu0 0.0
    %234 = vmatprep.subr.mxu0 0.0
    %235 = vmatpush2.msra.mxu0 0.0
    %236 = vmatprep.subr.mxu0 0.0
    %237 = vmatpush2.msra.mxu0 0.0
    %238 = vmatprep.subr.mxu0 0.0
    %239 = vmatpush2.msra.mxu0 0.0
    %240 = vmatprep.subr.mxu0 0.0
    %241 = vmatpush2.msra.mxu0 0.0
    %242 = vmatprep.subr.mxu0 0.0
    %243 = vmatpush2.msra.mxu0 0.0
    %244 = vmatprep.subr.mxu0 0.0
    %245 = vmatpush2.msra.mxu0 0.0
    %246 = vmatprep.subr.mxu0 0.0
    %247 = vmatpush2.msra.mxu0 0.0
    %248 = vmatprep.subr.mxu0 0.0
    %249 = vmatpush2.msra.mxu0 0.0
    %250 = vmatprep.mubr.f32.mxu0 0.0
    %251 = vmatmul.mubr.f32.gmra.mxu0 %v162
    %v252 = vpop.f32.mrf.mxu0
    %v253 = vadd.f32 %v184, %v252
    %v254 = vpop.f32.mrf.mxu0
    %255 = vdwg.mxu0
    %v256 = vmax.f32 %v253, 0.0
    %v257 = vld [vmem:[#allocation7] sm:$0xff]
    %v258 = vld [vmem:[#allocation7 + $0x8] sm:$0xff]
    %v259 = vld [vmem:[#allocation7 + $0x10] sm:$0xff]
    %v260 = vld [vmem:[#allocation7 + $0x18] sm:$0xff]
    %v261 = vld [vmem:[#allocation7 + $0x20] sm:$0xff]
    %v262 = vld [vmem:[#allocation7 + $0x28] sm:$0xff]
    %v263 = vld [vmem:[#allocation7 + $0x30] sm:$0xff]
    %v264 = vld [vmem:[#allocation7 + $0x38] sm:$0xff]
    %v265 = vld [vmem:[#allocation7 + $0x40] sm:$0xff]
    %v266 = vld [vmem:[#allocation7 + $0x48] sm:$0xff]
    %v267 = vld [vmem:[#allocation7 + $0x50] sm:$0xff]
    %v268 = vld [vmem:[#allocation7 + $0x58] sm:$0xff]
    %v269 = vld [vmem:[#allocation7 + $0x60] sm:$0xff]
    %v270 = vld [vmem:[#allocation7 + $0x68] sm:$0xff]
    %v271 = vld [vmem:[#allocation7 + $0x70] sm:$0xff]
    %v272 = vld [vmem:[#allocation7 + $0x78] sm:$0xff]
    %v273 = vld [vmem:[%s6] sm:$0x1]
    %v275 = vlaneseq
    %v276 = vshrl.u32 %v275, 7
    %v277 = vsub.s32 0, %v276
    %v278 = vrot.slane %v273, %v277
    %280 = vmatprep.subr.mxu0 0.0
    %281 = vmatpush1.msra.mxu0 %v272
    %282 = vmatprep.subr.mxu0 0.0
    %283 = vmatpush1.msra.mxu0 %v271
    %284 = vmatprep.subr.mxu0 0.0
    %285 = vmatpush1.msra.mxu0 %v270
    %286 = vmatprep.subr.mxu0 0.0
    %287 = vmatpush1.msra.mxu0 %v269
    %288 = vmatprep.subr.mxu0 0.0
    %289 = vmatpush1.msra.mxu0 %v268
    %290 = vmatprep.subr.mxu0 0.0
    %291 = vmatpush1.msra.mxu0 %v267
    %292 = vmatprep.subr.mxu0 0.0
    %293 = vmatpush1.msra.mxu0 %v266
    %294 = vmatprep.subr.mxu0 0.0
    %295 = vmatpush1.msra.mxu0 %v265
    %296 = vmatprep.subr.mxu0 0.0
    %297 = vmatpush1.msra.mxu0 %v264
    %298 = vmatprep.subr.mxu0 0.0
    %299 = vmatpush1.msra.mxu0 %v263
    %300 = vmatprep.subr.mxu0 0.0
    %301 = vmatpush1.msra.mxu0 %v262
    %302 = vmatprep.subr.mxu0 0.0
    %303 = vmatpush1.msra.mxu0 %v261
    %304 = vmatprep.subr.mxu0 0.0
    %305 = vmatpush1.msra.mxu0 %v260
    %306 = vmatprep.subr.mxu0 0.0
    %307 = vmatpush1.msra.mxu0 %v259
    %308 = vmatprep.subr.mxu0 0.0
    %309 = vmatpush1.msra.mxu0 %v258
    %310 = vmatprep.subr.mxu0 0.0
    %311 = vmatpush1.msra.mxu0 %v257
    %312 = vmatprep.subr.mxu0 0.0
    %313 = vmatpush2.msra.mxu0 0.0
    %314 = vmatprep.subr.mxu0 0.0
    %315 = vmatpush2.msra.mxu0 0.0
    %316 = vmatprep.subr.mxu0 0.0
    %317 = vmatpush2.msra.mxu0 0.0
    %318 = vmatprep.subr.mxu0 0.0
    %319 = vmatpush2.msra.mxu0 0.0
    %320 = vmatprep.subr.mxu0 0.0
    %321 = vmatpush2.msra.mxu0 0.0
    %322 = vmatprep.subr.mxu0 0.0
    %323 = vmatpush2.msra.mxu0 0.0
    %324 = vmatprep.subr.mxu0 0.0
    %325 = vmatpush2.msra.mxu0 0.0
    %326 = vmatprep.subr.mxu0 0.0
    %327 = vmatpush2.msra.mxu0 0.0
    %328 = vmatprep.subr.mxu0 0.0
    %329 = vmatpush2.msra.mxu0 0.0
    %330 = vmatprep.subr.mxu0 0.0
    %331 = vmatpush2.msra.mxu0 0.0
    %332 = vmatprep.subr.mxu0 0.0
    %333 = vmatpush2.msra.mxu0 0.0
    %334 = vmatprep.subr.mxu0 0.0
    %335 = vmatpush2.msra.mxu0 0.0
    %336 = vmatprep.subr.mxu0 0.0
    %337 = vmatpush2.msra.mxu0 0.0
    %338 = vmatprep.subr.mxu0 0.0
    %339 = vmatpush2.msra.mxu0 0.0
    %340 = vmatprep.subr.mxu0 0.0
    %341 = vmatpush2.msra.mxu0 0.0
    %342 = vmatprep.subr.mxu0 0.0
    %343 = vmatpush2.msra.mxu0 0.0
    %344 = vmatprep.mubr.f32.mxu0 0.0
    %345 = vmatmul.mubr.f32.gmra.mxu0 %v256
    %v346 = vpop.f32.mrf.mxu0
    %v347 = vadd.f32 %v278, %v346
    %v348 = vpop.f32.mrf.mxu0
    %349 = vdwg.mxu0
    %350 = vst [vmem:[#allocation8] sm:$0xff] %v347
    // Predicated region
    $region42: #{mlp_forward.1} parent=1 // pred_check
      _
    $region43: #{mlp_forward.1} parent=1 // pred_check_branch
      %352 = sbr.rel (0) target = $region45
    $region44: #{mlp_forward.1} parent=1 // pred_region
      %s354 = ssub.s32 128, 128
      %355 = vsyncadd [#allocation4], %s354
      %s357 = sshll.u32 [#allocation8], 4
      %s358 = int_to_ptr.vmem [resolvable:$true] %s357
      %360 = dma.vmem_to_hbm [thread:$0]  %s358, 128, %s7, [#allocation4]
    $region45: #{mlp_forward.1} parent=1 // pred_fallthru
      _
    // Predicated region
    $region46: #{mlp_forward.1} parent=1 // pred_check
      _
    $region47: #{mlp_forward.1} parent=1 // pred_check_branch
      %362 = sbr.rel (0) target = $region49
    $region48: #{mlp_forward.1} parent=1 // pred_region
      %363 = dma.done [#allocation4], 128
    $region49: #{mlp_forward.1} parent=1 // pred_fallthru
      _
    %364 = vsyncpa [#allocation3], 1
    %365 = vsyncpa [#allocation6], 1
    %366 = vsyncpa [#allocation4], 1

</llo_original>
